<compile_context>
chip_gen: v5e
topology: v5e:2x2
jax: 0.10.0
libtpu: 0.0.40
codegen_flags: <defaults>
</compile_context>

<pallas_src>
import functools

import jax
import jax.numpy as jnp
from jax.experimental import pallas as pl
from jax.experimental.pallas import tpu as pltpu


def _ffn_kernel(x_ref, gamma_ref, beta_ref, w1_ref, b1_ref, w2_ref, b2_ref,
                o_ref, xn_ref, acc_ref, *, eps: float):
    """One (row_tile, hidden_chunk) grid step.

    x_ref   : (tr, dim)       input rows (resident across the hidden axis)
    w1_ref  : (dim, tk) bf16  chunk of W1
    b1_ref  : (1, tk)   f32   chunk of b1
    w2_ref  : (tk, dim) bf16  chunk of W2
    o_ref   : (tr, dim)       output tile (written on the last hidden chunk)
    xn_ref  : (tr, dim) bf16  scratch: LayerNorm'd input (computed once at k==0)
    acc_ref : (tr, dim) f32   scratch: accumulator over hidden chunks
    """
    k = pl.program_id(1)

    @pl.when(k == 0)
    def _init():
        # LayerNorm in f32 (VPU/EUP), once per row tile.
        x = x_ref[...].astype(jnp.float32)
        mean = jnp.mean(x, axis=-1, keepdims=True)
        centered = x - mean
        var = jnp.mean(centered * centered, axis=-1, keepdims=True)
        xn = centered * jax.lax.rsqrt(var + eps)
        xn = xn * gamma_ref[...] + beta_ref[...]
        xn_ref[...] = xn.astype(xn_ref.dtype)      # bf16 MXU operand
        acc_ref[...] = jnp.zeros_like(acc_ref)

    # Linear 1 chunk: bf16 x bf16 -> f32; bias + Swish in f32.
    h = jnp.dot(xn_ref[...], w1_ref[...], preferred_element_type=jnp.float32)
    h = h + b1_ref[...]
    h = h * jax.nn.sigmoid(h)                       # Swish = x * sigmoid(x)

    # (Dropout: identity at inference.)

    # Linear 2 chunk: accumulate into the resident (tr, dim) f32 accumulator.
    acc_ref[...] += jnp.dot(h.astype(w2_ref.dtype), w2_ref[...],
                            preferred_element_type=jnp.float32)

    @pl.when(k == pl.num_programs(1) - 1)
    def _finalize():
        o_ref[...] = (acc_ref[...] + b2_ref[...]).astype(o_ref.dtype)


def _pick_hidden_chunk(hidden: int, max_chunk: int) -> int:
    """Largest lane-aligned (multiple-of-128) divisor of `hidden` <= max_chunk."""
    if hidden <= max_chunk:
        return hidden
    for tk in range(max_chunk - (max_chunk % 128), 127, -128):
        if hidden % tk == 0:
            return tk
    return hidden  # no lane-aligned divisor; keep it un-chunked


def feed_forward_module(inputs, gamma, beta, w1, b1, w2, b2,
                        *, eps: float = 1e-5, tile_rows: int = 256,
                        max_hidden_chunk: int = 512):
    """inputs: (batch, time, dim). Returns (batch, time, dim)."""
    batch, time, dim = inputs.shape
    hidden = w1.shape[1]
    rows = batch * time

    # Row tiling: pad rows up to a tile multiple so arbitrary batch*time works.
    if rows >= tile_rows:
        tr = tile_rows
    else:
        tr = max(8, ((rows + 7) // 8) * 8)
    rows_pad = ((rows + tr - 1) // tr) * tr
    n_row_tiles = rows_pad // tr

    x2d = inputs.reshape(rows, dim)
    if rows_pad != rows:
        x2d = jnp.pad(x2d, ((0, rows_pad - rows), (0, 0)))

    # Hidden-dim chunking (streams W1 / W2, fuses Swish into the accumulation).
    tk = _pick_hidden_chunk(hidden, max_hidden_chunk)
    n_k = hidden // tk

    # bf16 MXU operands; accumulation remains f32 inside the kernel.
    w1_bf = w1.astype(jnp.bfloat16)
    w2_bf = w2.astype(jnp.bfloat16)

    # LN params / biases stay f32 and 2D (last-two-dims layout rules).
    gamma2 = gamma.reshape(1, dim).astype(jnp.float32)
    beta2 = beta.reshape(1, dim).astype(jnp.float32)
    b1_2 = b1.reshape(1, hidden).astype(jnp.float32)
    b2_2 = b2.reshape(1, dim).astype(jnp.float32)

    out_dtype = inputs.dtype
    out_isize = jnp.dtype(out_dtype).itemsize
    kernel = functools.partial(_ffn_kernel, eps=eps)

    # Explicit VMEM budget: double-buffered streamed blocks + scratch + headroom.
    est = (2 * tr * dim * x2d.dtype.itemsize        # x tiles (double-buffered)
           + 2 * tr * dim * out_isize               # out tiles
           + 2 * dim * tk * 2 + 2 * tk * dim * 2    # W1 / W2 bf16 chunks
           + 2 * tk * 4 + 3 * dim * 4               # biases / LN params
           + tr * dim * 2 + tr * dim * 4            # xn / acc scratch
           + 2 * tr * tk * 4)                       # h intermediate headroom
    vmem_limit = int(min(max(est * 1.25 + (2 << 20), 32 << 20), 64 << 20))

    cost = pl.CostEstimate(
        flops=int(2 * rows_pad * dim * hidden * 2),
        transcendentals=int(rows_pad * hidden),
        bytes_accessed=int(x2d.size * x2d.dtype.itemsize
                           + w1_bf.size * 2 + w2_bf.size * 2
                           + (hidden + 3 * dim) * 4
                           + rows_pad * dim * out_isize))

    out2d = pl.pallas_call(
        kernel,
        out_shape=jax.ShapeDtypeStruct((rows_pad, dim), out_dtype),
        grid_spec=pltpu.PrefetchScalarGridSpec(
            num_scalar_prefetch=0,
            grid=(n_row_tiles, n_k),
            in_specs=[
                pl.BlockSpec((tr, dim), lambda i, k: (i, 0)),     # x tile
                pl.BlockSpec((1, dim), lambda i, k: (0, 0)),      # gamma
                pl.BlockSpec((1, dim), lambda i, k: (0, 0)),      # beta
                pl.BlockSpec((dim, tk), lambda i, k: (0, k)),     # W1 chunk
                pl.BlockSpec((1, tk), lambda i, k: (0, k)),       # b1 chunk
                pl.BlockSpec((tk, dim), lambda i, k: (k, 0)),     # W2 chunk
                pl.BlockSpec((1, dim), lambda i, k: (0, 0)),      # b2
            ],
            out_specs=pl.BlockSpec((tr, dim), lambda i, k: (i, 0)),
            scratch_shapes=[
                pltpu.VMEM((tr, dim), jnp.bfloat16),   # LayerNorm'd input
                pltpu.VMEM((tr, dim), jnp.float32),    # output accumulator
            ],
        ),
        compiler_params=pltpu.CompilerParams(
            dimension_semantics=("parallel", "arbitrary"),
            vmem_limit_bytes=vmem_limit),
        cost_estimate=cost,
    )(x2d, gamma2, beta2, w1_bf, b1_2, w2_bf, b2_2)

    return out2d[:rows].reshape(batch, time, dim)


def _reference(inputs, gamma, beta, w1, b1, w2, b2, eps=1e-5):
    """Pure-JAX reference mirroring the kernel's bf16-operand / f32-accum math."""
    x = inputs.astype(jnp.float32)
    mean = jnp.mean(x, axis=-1, keepdims=True)
    var = jnp.mean((x - mean) ** 2, axis=-1, keepdims=True)
    xn = (x - mean) * jax.lax.rsqrt(var + eps) * gamma + beta
    h = jnp.dot(xn.astype(jnp.bfloat16), w1.astype(jnp.bfloat16),
                preferred_element_type=jnp.float32) + b1
    h = h * jax.nn.sigmoid(h)
    y = jnp.dot(h.astype(jnp.bfloat16), w2.astype(jnp.bfloat16),
                preferred_element_type=jnp.float32) + b2
    return y.astype(inputs.dtype)


def _run_case(key, batch, time, encoder_dim, expansion, **kwargs):
    hidden = encoder_dim * expansion
    k_x, k_w1, k_b1, k_w2, k_b2 = jax.random.split(key, 5)

    inputs = jax.random.normal(k_x, (batch, time, encoder_dim), dtype=jnp.float32)
    gamma = jnp.ones((encoder_dim,), dtype=jnp.float32)   # PyTorch LN default init
    beta = jnp.zeros((encoder_dim,), dtype=jnp.float32)
    # Linear params stored as (in, out): x @ W matches PyTorch x @ W.T.
    w1 = jax.random.normal(k_w1, (encoder_dim, hidden), dtype=jnp.float32) * 0.05
    b1 = jax.random.normal(k_b1, (hidden,), dtype=jnp.float32) * 0.01
    w2 = jax.random.normal(k_w2, (hidden, encoder_dim), dtype=jnp.float32) * 0.05
    b2 = jax.random.normal(k_b2, (encoder_dim,), dtype=jnp.float32) * 0.01

    out = jax.block_until_ready(
        feed_forward_module(inputs, gamma, beta, w1, b1, w2, b2, **kwargs))
    ref = _reference(inputs, gamma, beta, w1, b1, w2, b2)

    assert out.shape == (batch, time, encoder_dim)
    assert jnp.allclose(out, ref, atol=5e-3, rtol=5e-3), (
        f"mismatch vs reference: max abs err "
        f"{float(jnp.max(jnp.abs(out - ref)))}")


if __name__ == "__main__":
    key = jax.random.PRNGKey(0)
    k1, k2 = jax.random.split(key, 2)

    # Case 1: small config consistent with the module (expansion_factor=4).
    _run_case(k1, batch=2, time=8, encoder_dim=32, expansion=4)

    # Case 2: exercises row padding (18 rows) and the hidden-chunk accumulator
    # path (hidden=256 split into two 128-wide chunks).
    _run_case(k2, batch=2, time=9, encoder_dim=64, expansion=4,
              max_hidden_chunk=128)

    print("KERNEL_OK")
</pallas_src>

<mosaic_0001>
module attributes {stable_mosaic.version = 11 : i64} {
  func.func @_ffn_kernel(%arg0: i32, %arg1: i32, %arg2: memref<16x32xf32, #tpu.memory_space<vmem>>, %arg3: memref<1x32xf32, #tpu.memory_space<vmem>>, %arg4: memref<1x32xf32, #tpu.memory_space<vmem>>, %arg5: memref<32x128xbf16, #tpu.memory_space<vmem>>, %arg6: memref<1x128xf32, #tpu.memory_space<vmem>>, %arg7: memref<128x32xbf16, #tpu.memory_space<vmem>>, %arg8: memref<1x32xf32, #tpu.memory_space<vmem>>, %arg9: memref<16x32xf32, #tpu.memory_space<vmem>>, %arg10: memref<16x32xbf16, #tpu.memory_space<vmem>>, %arg11: memref<16x32xf32, #tpu.memory_space<vmem>>) attributes {dimension_semantics = [#tpu.dimension_semantics<parallel>, #tpu.dimension_semantics<arbitrary>], iteration_bounds = array<i64: 1, 1>, scalar_prefetch = 0 : i64, scratch_operands = 2 : i64, tpu.core_type = #tpu.core_type<tc>, window_params = [{transform_indices = @transform_0, window_bounds = array<i64: 16, 32>}, {pipeline_mode = #tpu.pipeline_mode<synchronous>, transform_indices = @transform_1, window_bounds = array<i64: 1, 32>}, {pipeline_mode = #tpu.pipeline_mode<synchronous>, transform_indices = @transform_2, window_bounds = array<i64: 1, 32>}, {transform_indices = @transform_3, window_bounds = array<i64: 32, 128>}, {transform_indices = @transform_4, window_bounds = array<i64: 1, 128>}, {transform_indices = @transform_5, window_bounds = array<i64: 128, 32>}, {pipeline_mode = #tpu.pipeline_mode<synchronous>, transform_indices = @transform_6, window_bounds = array<i64: 1, 32>}, {transform_indices = @transform_7, window_bounds = array<i64: 16, 32>}]} {
    %c0_i32 = arith.constant 0 : i32
    %0 = arith.cmpi eq, %arg1, %c0_i32 : i32
    %1 = arith.extui %0 : i1 to i32
    %c0_i32_0 = arith.constant 0 : i32
    %2 = arith.cmpi ne, %1, %c0_i32_0 : i32
    scf.if %2 {
      %c0_16 = arith.constant 0 : index
      %c0_17 = arith.constant 0 : index
      %24 = vector.load %arg2[%c0_16, %c0_17] : memref<16x32xf32, #tpu.memory_space<vmem>>, vector<16x32xf32>
      %cst_18 = arith.constant dense<0.000000e+00> : vector<16xf32>
      %25 = vector.multi_reduction <add>, %24, %cst_18 [1] : vector<16x32xf32> to vector<16xf32>
      %26 = vector.shape_cast %25 : vector<16xf32> to vector<16x1xf32>
      %cst_19 = arith.constant 3.200000e+01 : f32
      %27 = vector.broadcast %cst_19 : f32 to vector<16x1xf32>
      %28 = arith.divf %26, %27 : vector<16x1xf32>
      %29 = vector.broadcast %28 : vector<16x1xf32> to vector<16x32xf32>
      %30 = arith.subf %24, %29 : vector<16x32xf32>
      %31 = arith.mulf %30, %30 : vector<16x32xf32>
      %cst_20 = arith.constant dense<0.000000e+00> : vector<16xf32>
      %32 = vector.multi_reduction <add>, %31, %cst_20 [1] : vector<16x32xf32> to vector<16xf32>
      %33 = vector.shape_cast %32 : vector<16xf32> to vector<16x1xf32>
      %cst_21 = arith.constant 3.200000e+01 : f32
      %34 = vector.broadcast %cst_21 : f32 to vector<16x1xf32>
      %35 = arith.divf %33, %34 : vector<16x1xf32>
      %cst_22 = arith.constant 9.99999974E-6 : f32
      %36 = vector.broadcast %cst_22 : f32 to vector<16x1xf32>
      %37 = arith.addf %35, %36 : vector<16x1xf32>
      %38 = math.rsqrt %37 : vector<16x1xf32>
      %39 = vector.broadcast %38 : vector<16x1xf32> to vector<16x32xf32>
      %40 = arith.mulf %30, %39 : vector<16x32xf32>
      %c0_23 = arith.constant 0 : index
      %c0_24 = arith.constant 0 : index
      %41 = vector.load %arg3[%c0_23, %c0_24] : memref<1x32xf32, #tpu.memory_space<vmem>>, vector<1x32xf32>
      %42 = vector.broadcast %41 : vector<1x32xf32> to vector<16x32xf32>
      %43 = arith.mulf %40, %42 : vector<16x32xf32>
      %c0_25 = arith.constant 0 : index
      %c0_26 = arith.constant 0 : index
      %44 = vector.load %arg4[%c0_25, %c0_26] : memref<1x32xf32, #tpu.memory_space<vmem>>, vector<1x32xf32>
      %45 = vector.broadcast %44 : vector<1x32xf32> to vector<16x32xf32>
      %46 = arith.addf %43, %45 : vector<16x32xf32>
      %47 = arith.truncf %46 : vector<16x32xf32> to vector<16x32xbf16>
      %c0_27 = arith.constant 0 : index
      %c0_28 = arith.constant 0 : index
      %48 = vector.load %arg10[%c0_27, %c0_28] : memref<16x32xbf16, #tpu.memory_space<vmem>>, vector<16x32xbf16>
      tpu.vector_store %arg10[%c0_27, %c0_28], %47 {strides = array<i32>} : memref<16x32xbf16, #tpu.memory_space<vmem>>, vector<16x32xbf16>,
      %cst_29 = arith.constant 0.000000e+00 : f32
      %49 = vector.broadcast %cst_29 : f32 to vector<16x32xf32>
      %c0_30 = arith.constant 0 : index
      %c0_31 = arith.constant 0 : index
      %50 = vector.load %arg11[%c0_30, %c0_31] : memref<16x32xf32, #tpu.memory_space<vmem>>, vector<16x32xf32>
      tpu.vector_store %arg11[%c0_30, %c0_31], %49 {strides = array<i32>} : memref<16x32xf32, #tpu.memory_space<vmem>>, vector<16x32xf32>,
    } else {
    }
    %c0 = arith.constant 0 : index
    %c0_1 = arith.constant 0 : index
    %3 = vector.load %arg10[%c0, %c0_1] : memref<16x32xbf16, #tpu.memory_space<vmem>>, vector<16x32xbf16>
    %c0_2 = arith.constant 0 : index
    %c0_3 = arith.constant 0 : index
    %4 = vector.load %arg5[%c0_2, %c0_3] : memref<32x128xbf16, #tpu.memory_space<vmem>>, vector<32x128xbf16>
    %cst = arith.constant dense<0.000000e+00> : vector<16x128xf32>
    %5 = tpu.matmul %3, %4, %cst {dimension_numbers = #tpu.dot_dimension_numbers<[1], [0], [0], [1], [0, 0, 1, 1], [], []>} : vector<16x32xbf16>, vector<32x128xbf16>, vector<16x128xf32> -> vector<16x128xf32>
    %c0_4 = arith.constant 0 : index
    %c0_5 = arith.constant 0 : index
    %6 = vector.load %arg6[%c0_4, %c0_5] : memref<1x128xf32, #tpu.memory_space<vmem>>, vector<1x128xf32>
    %7 = vector.broadcast %6 : vector<1x128xf32> to vector<16x128xf32>
    %8 = arith.addf %5, %7 : vector<16x128xf32>
    %9 = arith.negf %8 : vector<16x128xf32>
    %10 = math.exp %9 : vector<16x128xf32>
    %cst_6 = arith.constant 1.000000e+00 : f32
    %11 = vector.broadcast %cst_6 : f32 to vector<16x128xf32>
    %12 = arith.addf %11, %10 : vector<16x128xf32>
    %13 = arith.divf %11, %12 : vector<16x128xf32>
    %14 = arith.mulf %8, %13 : vector<16x128xf32>
    %c0_7 = arith.constant 0 : index
    %c0_8 = arith.constant 0 : index
    %15 = vector.load %arg11[%c0_7, %c0_8] : memref<16x32xf32, #tpu.memory_space<vmem>>, vector<16x32xf32>
    %16 = arith.truncf %14 : vector<16x128xf32> to vector<16x128xbf16>
    %c0_9 = arith.constant 0 : index
    %c0_10 = arith.constant 0 : index
    %17 = vector.load %arg7[%c0_9, %c0_10] : memref<128x32xbf16, #tpu.memory_space<vmem>>, vector<128x32xbf16>
    %cst_11 = arith.constant dense<0.000000e+00> : vector<16x32xf32>
    %18 = tpu.matmul %16, %17, %cst_11 {dimension_numbers = #tpu.dot_dimension_numbers<[1], [0], [0], [1], [0, 0, 1, 1], [], []>} : vector<16x128xbf16>, vector<128x32xbf16>, vector<16x32xf32> -> vector<16x32xf32>
    %19 = arith.addf %15, %18 : vector<16x32xf32>
    %c0_12 = arith.constant 0 : index
    %c0_13 = arith.constant 0 : index
    %20 = vector.load %arg11[%c0_12, %c0_13] : memref<16x32xf32, #tpu.memory_space<vmem>>, vector<16x32xf32>
    tpu.vector_store %arg11[%c0_12, %c0_13], %19 {strides = array<i32>} : memref<16x32xf32, #tpu.memory_space<vmem>>, vector<16x32xf32>,
    %c0_i32_14 = arith.constant 0 : i32
    %21 = arith.cmpi eq, %arg1, %c0_i32_14 : i32
    %22 = arith.extui %21 : i1 to i32
    %c0_i32_15 = arith.constant 0 : i32
    %23 = arith.cmpi ne, %22, %c0_i32_15 : i32
    scf.if %23 {
      %c0_16 = arith.constant 0 : index
      %c0_17 = arith.constant 0 : index
      %24 = vector.load %arg11[%c0_16, %c0_17] : memref<16x32xf32, #tpu.memory_space<vmem>>, vector<16x32xf32>
      %c0_18 = arith.constant 0 : index
      %c0_19 = arith.constant 0 : index
      %25 = vector.load %arg8[%c0_18, %c0_19] : memref<1x32xf32, #tpu.memory_space<vmem>>, vector<1x32xf32>
      %26 = vector.broadcast %25 : vector<1x32xf32> to vector<16x32xf32>
      %27 = arith.addf %24, %26 : vector<16x32xf32>
      %c0_20 = arith.constant 0 : index
      %c0_21 = arith.constant 0 : index
      %28 = vector.load %arg9[%c0_20, %c0_21] : memref<16x32xf32, #tpu.memory_space<vmem>>, vector<16x32xf32>
      tpu.vector_store %arg9[%c0_20, %c0_21], %27 {strides = array<i32>} : memref<16x32xf32, #tpu.memory_space<vmem>>, vector<16x32xf32>,
    } else {
    }
    return
  }
  func.func @transform_0(%arg0: i32, %arg1: i32) -> (i32, i32) {
    %c0_i32 = arith.constant 0 : i32
    %c0_i32_0 = arith.constant 0 : i32
    return %arg0, %c0_i32 : i32, i32
  }
  func.func @transform_1(%arg0: i32, %arg1: i32) -> (i32, i32) {
    %c0_i32 = arith.constant 0 : i32
    %c0_i32_0 = arith.constant 0 : i32
    %c0_i32_1 = arith.constant 0 : i32
    return %c0_i32, %c0_i32_0 : i32, i32
  }
  func.func @transform_2(%arg0: i32, %arg1: i32) -> (i32, i32) {
    %c0_i32 = arith.constant 0 : i32
    %c0_i32_0 = arith.constant 0 : i32
    %c0_i32_1 = arith.constant 0 : i32
    return %c0_i32, %c0_i32_0 : i32, i32
  }
  func.func @transform_3(%arg0: i32, %arg1: i32) -> (i32, i32) {
    %c0_i32 = arith.constant 0 : i32
    %c0_i32_0 = arith.constant 0 : i32
    return %c0_i32, %arg1 : i32, i32
  }
  func.func @transform_4(%arg0: i32, %arg1: i32) -> (i32, i32) {
    %c0_i32 = arith.constant 0 : i32
    %c0_i32_0 = arith.constant 0 : i32
    return %c0_i32, %arg1 : i32, i32
  }
  func.func @transform_5(%arg0: i32, %arg1: i32) -> (i32, i32) {
    %c0_i32 = arith.constant 0 : i32
    %c0_i32_0 = arith.constant 0 : i32
    return %arg1, %c0_i32 : i32, i32
  }
  func.func @transform_6(%arg0: i32, %arg1: i32) -> (i32, i32) {
    %c0_i32 = arith.constant 0 : i32
    %c0_i32_0 = arith.constant 0 : i32
    %c0_i32_1 = arith.constant 0 : i32
    return %c0_i32, %c0_i32_0 : i32, i32
  }
  func.func @transform_7(%arg0: i32, %arg1: i32) -> (i32, i32) {
    %c0_i32 = arith.constant 0 : i32
    %c0_i32_0 = arith.constant 0 : i32
    return %arg0, %c0_i32 : i32, i32
  }
}

</mosaic_0001>

<llo_original>
// kernel: tpu_custom_call.1
$region0: #{tpu_custom_call.1}
  #allocation0 [shape = 'u32[]', space=smem, size = 0x4, offset = 0x4, fixed_abs, tag = 'smem constant byte address 0x4 - core index']
  #allocation1 [shape = 'u32[72,128]{1,0:T(1,128)}', space=vmem, size = 0x9000, scoped, tag = 'internal scratch']
  #allocation2 [shape = 'bf16[16,32]{1,0:T(8,128)(2,1)}', space=vmem, size = 0x1000, scoped, tag = 'scratch operand']
  #allocation3 [shape = 'f32[16,32]{1,0:T(8,128)}', space=vmem, size = 0x2000, scoped, tag = 'scratch operand']
  %s0 = inlined_call_operand.vmem [shape: f32[16,32], index: 0, kind: input, shape index: {}]
  %s1 = inlined_call_operand.vmem [shape: f32[1,32], index: 1, kind: input, shape index: {}]
  %s2 = inlined_call_operand.vmem [shape: f32[1,32], index: 2, kind: input, shape index: {}]
  %s3 = inlined_call_operand.vmem [shape: bf16[32,128], index: 3, kind: input, shape index: {}]
  %s4 = inlined_call_operand.vmem [shape: f32[1,128], index: 4, kind: input, shape index: {}]
  %s5 = inlined_call_operand.vmem [shape: bf16[128,32], index: 5, kind: input, shape index: {}]
  %s6 = inlined_call_operand.vmem [shape: f32[1,32], index: 6, kind: input, shape index: {}]
  %s7 = inlined_call_operand.hbm [shape: f32[16,32], index: 7, kind: output, shape index: {}]
  %s8 = sld [smem:[#allocation0]]
  $region46: #{tpu_custom_call.1} parent=0
    _
  %s10 = ssub.s32 1, %s8
  %s11 = scalar_select 0, %s10, %s8
  $region1: #{tpu_custom_call.1} parent=0
    #allocation4 [shape = 'u8[8192]{0}', space=vmem, size = 0x2000, scoped, tag = 'output window, operand 0, single buffered']
    #allocation5 [shape = 's32[1]{0}', space=sflag, size = 0x4, scoped, tag = 'scoped memory for tpu_custom_call.1']
    %12 = vsyncpa [#allocation5], 0
    // Predicated region
    $region2: #{tpu_custom_call.1} parent=1 // pred_check
      _
    $region3: #{tpu_custom_call.1} parent=1 // pred_check_branch
      %14 = sbr.rel (0) target = $region5
    $region4: #{tpu_custom_call.1} parent=1 // pred_region
      _
    $region5: #{tpu_custom_call.1} parent=1 // pred_fallthru
      _
    // Predicated region
    $region6: #{tpu_custom_call.1} parent=1 // pred_check
      _
    $region7: #{tpu_custom_call.1} parent=1 // pred_check_branch
      %16 = sbr.rel (0) target = $region9
    $region8: #{tpu_custom_call.1} parent=1 // pred_region
      _
    $region9: #{tpu_custom_call.1} parent=1 // pred_fallthru
      _
    // Predicated region
    $region10: #{tpu_custom_call.1} parent=1 // pred_check
      _
    $region11: #{tpu_custom_call.1} parent=1 // pred_check_branch
      %18 = sbr.rel (0) target = $region13
    $region12: #{tpu_custom_call.1} parent=1 // pred_region
      _
    $region13: #{tpu_custom_call.1} parent=1 // pred_fallthru
      _
    // Predicated region
    $region14: #{tpu_custom_call.1} parent=1 // pred_check
      _
    $region15: #{tpu_custom_call.1} parent=1 // pred_check_branch
      %20 = sbr.rel (0) target = $region17
    $region16: #{tpu_custom_call.1} parent=1 // pred_region
      _
    $region17: #{tpu_custom_call.1} parent=1 // pred_fallthru
      _
    // Predicated region
    $region18: #{tpu_custom_call.1} parent=1 // pred_check
      _
    $region19: #{tpu_custom_call.1} parent=1 // pred_check_branch
      %22 = sbr.rel (0) target = $region21
    $region20: #{tpu_custom_call.1} parent=1 // pred_region
      _
    $region21: #{tpu_custom_call.1} parent=1 // pred_fallthru
      _
    // Predicated region
    $region22: #{tpu_custom_call.1} parent=1 // pred_check
      _
    $region23: #{tpu_custom_call.1} parent=1 // pred_check_branch
      %24 = sbr.rel (0) target = $region25
    $region24: #{tpu_custom_call.1} parent=1 // pred_region
      _
    $region25: #{tpu_custom_call.1} parent=1 // pred_fallthru
      _
    // Predicated region
    $region26: #{tpu_custom_call.1} parent=1 // pred_check
      _
    $region27: #{tpu_custom_call.1} parent=1 // pred_check_branch
      %26 = sbr.rel (0) target = $region29
    $region28: #{tpu_custom_call.1} parent=1 // pred_region
      _
    $region29: #{tpu_custom_call.1} parent=1 // pred_fallthru
      _
    %p28 = scmp.eq.s32.totalorder 0, 0
    // Predicated region
    $region30: #{tpu_custom_call.1} parent=1 // pred_check
      %p29 = pneg %p28
    $region31: #{tpu_custom_call.1} parent=1 // pred_check_branch
      %31 = sbr.rel (%p29) target = $region33
    $region32: #{tpu_custom_call.1} parent=1 // pred_region
      %v32 = vld [vmem:[%s0] sm:$0xff]
      %v33 = vld [vmem:[%s0 + $0x8] sm:$0xff]
      %vm34 = vcmask 261120
      %v35 = vsel %vm34, %v32, 0.0
      %36 = vadd.xlane.f32.xlu0 %v35
      %v37 = vpop.xlane.xlu0 %36
      %v38 = vsel %vm34, %v33, 0.0
      %39 = vadd.xlane.f32.xlu0 %v38
      %v40 = vpop.xlane.xlu0 %39
      %v41 = vrcp.pop 32.0
      %v42 = vmul.f32 32.0, %v41
      %v43 = vsub.f32 1.0, %v42
      %v44 = vmul.f32 %v41, %v43
      %v45 = vadd.f32 %v41, %v44
      %vm46 = vweird.f32 %v41
      %v47 = vsel %vm46, %v41, %v45
      %v48 = vmul.f32 %v37, %v47
      %v49 = vmul.f32 %v40, %v47
      %v50 = vsub.f32 %v32, %v48
      %v51 = vsub.f32 %v33, %v49
      %v52 = vmul.f32 %v50, %v50
      %v53 = vmul.f32 %v51, %v51
      %v54 = vsel %vm34, %v52, 0.0
      %55 = vadd.xlane.f32.xlu0 %v54
      %v56 = vpop.xlane.xlu0 %55
      %v57 = vsel %vm34, %v53, 0.0
      %58 = vadd.xlane.f32.xlu0 %v57
      %v59 = vpop.xlane.xlu0 %58
      %v60 = vmul.f32 %v56, %v47
      %v61 = vmul.f32 %v59, %v47
      %v62 = vadd.f32 %v60, 1e-05
      %v63 = vadd.f32 %v61, 1e-05
      %v64 = vrsqrt.pop %v62
      %v65 = vmul.f32 %v64, %v62
      %v66 = vmul.f32 %v65, %v64
      %v67 = vmul.f32 0.5, %v66
      %v68 = vsub.f32 1.5, %v67
      %v69 = vmul.f32 %v64, %v68
      %vm70 = vweird.f32 %v62
      %vm71 = vweird.f32 %v64
      %vm72 = vmor %vm70, %vm71
      %v73 = vsel %vm72, %v64, %v69
      %v74 = vrsqrt.pop %v63
      %v75 = vmul.f32 %v74, %v63
      %v76 = vmul.f32 %v75, %v74
      %v77 = vmul.f32 0.5, %v76
      %v78 = vsub.f32 1.5, %v77
      %v79 = vmul.f32 %v74, %v78
      %vm80 = vweird.f32 %v63
      %vm81 = vweird.f32 %v74
      %vm82 = vmor %vm80, %vm81
      %v83 = vsel %vm82, %v74, %v79
      %v84 = vmul.f32 %v50, %v73
      %v85 = vmul.f32 %v51, %v83
      %v86 = vld [vmem:[%s1] sm:$0x1]
      %v88 = vperm.slane %v86, 0
      %v90 = vmul.f32 %v84, %v88
      %v91 = vmul.f32 %v85, %v88
      %v92 = vld [vmem:[%s2] sm:$0x1]
      %v94 = vperm.slane %v92, 0
      %v96 = vadd.f32 %v90, %v94
      %v97 = vadd.f32 %v91, %v94
      %v98 = vpack.c.bf16 %v96, %v96
      %v99 = vpack.c.bf16 %v97, %v97
      %vm100 = vcmask 257024
      %101 = vst.msk [vmem:[#allocation2] sm:$0xf] %vm100, %v98
      %102 = vst.msk [vmem:[#allocation2 + $0x4] sm:$0xf] %vm100, %v99
      %103 = vst.msk [vmem:[#allocation3] sm:$0xff] %vm34, 0.0
      %104 = vst.msk [vmem:[#allocation3 + $0x8] sm:$0xff] %vm34, 0.0
    $region33: #{tpu_custom_call.1} parent=1 // pred_fallthru
      _
    %v105 = vld [vmem:[#allocation2] sm:$0xf]
    %v106 = vld [vmem:[#allocation2 + $0x4] sm:$0xf]
    %v107 = vld [vmem:[%s3] sm:$0xf]
    %v108 = vld [vmem:[%s3 + $0x4] sm:$0xf]
    %v109 = vld [vmem:[%s3 + $0x8] sm:$0xf]
    %v110 = vld [vmem:[%s3 + $0xc] sm:$0xf]
    %v111 = vld [vmem:[%s4] sm:$0x1]
    %v113 = vperm.slane %v111, 0
    %v117 = vunpack.c.l.b16 %v105
    %v118 = vunpack.c.l.b16 %v106
    %v119 = vpack.c.b16 %v118, %v117
    %v124 = vunpack.c.l.b16 %v107
    %v125 = vunpack.c.l.b16 %v108
    %v126 = vunpack.c.l.b16 %v109
    %v127 = vunpack.c.l.b16 %v110
    %v128 = vpack.c.b16 %v125, %v124
    %v129 = vpack.c.b16 %v127, %v126
    %vm132 = vcmask 261120
    %v134 = vsel %vm132, %v119, 0
    %136 = vmatpush.bf16.msra.mxu0 0
    %137 = vmatpush.bf16.msra.mxu0 0
    %138 = vmatpush.bf16.msra.mxu0 0
    %139 = vmatpush.bf16.msra.mxu0 0
    %140 = vmatpush.bf16.msra.mxu0 0
    %141 = vmatpush.bf16.msra.mxu0 0
    %142 = vmatpush.bf16.msra.mxu0 %v129
    %143 = vmatpush.bf16.msra.mxu0 %v128
    %144 = vmatmul.bf16.gmra.mxu0 %v134
    %v145 = vpop.f32.mrf.mxu0
    %v146 = vadd.f32 %v113, %v145
    %v147 = vpop.f32.mrf.mxu0
    %v148 = vadd.f32 %v113, %v147
    %149 = vdwg.mxu0
    %v150 = vxor.u32 %v146, 2147483648
    %v151 = vxor.u32 %v148, 2147483648
    %v152 = vmul.f32 %v150, 1.442695
    %v153 = vpow.pop %v152
    %v154 = vmul.f32 %v151, 1.442695
    %v155 = vpow.pop %v154
    %v156 = vadd.f32 %v153, 1.0
    %v157 = vadd.f32 %v155, 1.0
    %v158 = vrcp.pop %v156
    %v159 = vmul.f32 %v156, %v158
    %v160 = vsub.f32 1.0, %v159
    %v161 = vmul.f32 %v158, %v160
    %v162 = vadd.f32 %v158, %v161
    %vm163 = vweird.f32 %v156
    %vm164 = vweird.f32 %v158
    %vm165 = vmor %vm163, %vm164
    %v166 = vsel %vm165, %v158, %v162
    %v167 = vand.u32 2147483647, %v156
    %vm168 = vcmp.eq.f32.partialorder %v167, 8.507059e+37
    %v169 = vand.u32 %v156, 2147483648
    %v170 = vor.u32 1.1754944e-38, %v169
    %v171 = vsel %vm168, %v170, %v166
    %v172 = vmul.f32 1.0, %v171
    %v173 = vrcp.pop %v157
    %v174 = vmul.f32 %v157, %v173
    %v175 = vsub.f32 1.0, %v174
    %v176 = vmul.f32 %v173, %v175
    %v177 = vadd.f32 %v173, %v176
    %vm178 = vweird.f32 %v157
    %vm179 = vweird.f32 %v173
    %vm180 = vmor %vm178, %vm179
    %v181 = vsel %vm180, %v173, %v177
    %v182 = vand.u32 2147483647, %v157
    %vm183 = vcmp.eq.f32.partialorder %v182, 8.507059e+37
    %v184 = vand.u32 %v157, 2147483648
    %v185 = vor.u32 1.1754944e-38, %v184
    %v186 = vsel %vm183, %v185, %v181
    %v187 = vmul.f32 1.0, %v186
    %v188 = vmul.f32 %v146, %v172
    %v189 = vmul.f32 %v148, %v187
    %v190 = vld [vmem:[#allocation3] sm:$0xff]
    %v191 = vld [vmem:[#allocation3 + $0x8] sm:$0xff]
    %v192 = vpack.c.bf16 %v189, %v188
    %v193 = vld [vmem:[%s5] sm:$0xf]
    %v194 = vld [vmem:[%s5 + $0x4] sm:$0xf]
    %v195 = vld [vmem:[%s5 + $0x8] sm:$0xf]
    %v196 = vld [vmem:[%s5 + $0xc] sm:$0xf]
    %v197 = vld [vmem:[%s5 + $0x10] sm:$0xf]
    %v198 = vld [vmem:[%s5 + $0x14] sm:$0xf]
    %v199 = vld [vmem:[%s5 + $0x18] sm:$0xf]
    %v200 = vld [vmem:[%s5 + $0x1c] sm:$0xf]
    %v201 = vld [vmem:[%s5 + $0x20] sm:$0xf]
    %v202 = vld [vmem:[%s5 + $0x24] sm:$0xf]
    %v203 = vld [vmem:[%s5 + $0x28] sm:$0xf]
    %v204 = vld [vmem:[%s5 + $0x2c] sm:$0xf]
    %v205 = vld [vmem:[%s5 + $0x30] sm:$0xf]
    %v206 = vld [vmem:[%s5 + $0x34] sm:$0xf]
    %v207 = vld [vmem:[%s5 + $0x38] sm:$0xf]
    %v208 = vld [vmem:[%s5 + $0x3c] sm:$0xf]
    %v225 = vunpack.c.l.b16 %v193
    %v226 = vunpack.c.l.b16 %v194
    %v227 = vunpack.c.l.b16 %v195
    %v228 = vunpack.c.l.b16 %v196
    %v229 = vunpack.c.l.b16 %v197
    %v230 = vunpack.c.l.b16 %v198
    %v231 = vunpack.c.l.b16 %v199
    %v232 = vunpack.c.l.b16 %v200
    %v233 = vunpack.c.l.b16 %v201
    %v234 = vunpack.c.l.b16 %v202
    %v235 = vunpack.c.l.b16 %v203
    %v236 = vunpack.c.l.b16 %v204
    %v237 = vunpack.c.l.b16 %v205
    %v238 = vunpack.c.l.b16 %v206
    %v239 = vunpack.c.l.b16 %v207
    %v240 = vunpack.c.l.b16 %v208
    %v241 = vpack.c.b16 %v226, %v225
    %v242 = vpack.c.b16 %v228, %v227
    %v243 = vpack.c.b16 %v230, %v229
    %v244 = vpack.c.b16 %v232, %v231
    %v245 = vpack.c.b16 %v234, %v233
    %v246 = vpack.c.b16 %v236, %v235
    %v247 = vpack.c.b16 %v238, %v237
    %v248 = vpack.c.b16 %v240, %v239
    %257 = vmatpush.bf16.msra.mxu0 %v248
    %258 = vmatpush.bf16.msra.mxu0 %v247
    %259 = vmatpush.bf16.msra.mxu0 %v246
    %260 = vmatpush.bf16.msra.mxu0 %v245
    %261 = vmatpush.bf16.msra.mxu0 %v244
    %262 = vmatpush.bf16.msra.mxu0 %v243
    %263 = vmatpush.bf16.msra.mxu0 %v242
    %264 = vmatpush.bf16.msra.mxu0 %v241
    %265 = vmatmul.bf16.gmra.mxu0 %v192
    %v266 = vpop.f32.mrf.mxu0
    %v267 = vadd.f32 0.0, %v266
    %v268 = vpop.f32.mrf.mxu0
    %v269 = vadd.f32 0.0, %v268
    %270 = vdwg.mxu0
    %v271 = vadd.f32 %v190, %v267
    %v272 = vadd.f32 %v191, %v269
    %273 = vst.msk [vmem:[#allocation3] sm:$0xff] %vm132, %v271
    %274 = vst.msk [vmem:[#allocation3 + $0x8] sm:$0xff] %vm132, %v272
    // Predicated region
    $region34: #{tpu_custom_call.1} parent=1 // pred_check
      %p275 = pneg %p28
    $region35: #{tpu_custom_call.1} parent=1 // pred_check_branch
      %277 = sbr.rel (%p275) target = $region37
    $region36: #{tpu_custom_call.1} parent=1 // pred_region
      %v278 = vld [vmem:[#allocation3] sm:$0xff]
      %v279 = vld [vmem:[#allocation3 + $0x8] sm:$0xff]
      %v280 = vld [vmem:[%s6] sm:$0x1]
      %v282 = vperm.slane %v280, 0
      %v284 = vadd.f32 %v278, %v282
      %v285 = vadd.f32 %v279, %v282
      %286 = vst.msk [vmem:[#allocation4] sm:$0xff] %vm132, %v284
      %287 = vst.msk [vmem:[#allocation4 + $0x8] sm:$0xff] %vm132, %v285
    $region37: #{tpu_custom_call.1} parent=1 // pred_fallthru
      _
    // Predicated region
    $region38: #{tpu_custom_call.1} parent=1 // pred_check
      _
    $region39: #{tpu_custom_call.1} parent=1 // pred_check_branch
      %289 = sbr.rel (0) target = $region41
    $region40: #{tpu_custom_call.1} parent=1 // pred_region
      %291 = vsyncadd [#allocation5], 0
      %s292 = sshll.u32 [#allocation4], 4
      %s293 = int_to_ptr.vmem [resolvable:$true] %s292
      %s294 = sshll.u32 %s7, 4
      %s295 = int_to_ptr.hbm [resolvable:$true] %s294
      %300 = dma.vmem_to_hbm [thread:$0]  %s293, 256, %s295, [#allocation5], 128, 128, 8
    $region41: #{tpu_custom_call.1} parent=1 // pred_fallthru
      _
    // Predicated region
    $region42: #{tpu_custom_call.1} parent=1 // pred_check
      _
    $region43: #{tpu_custom_call.1} parent=1 // pred_check_branch
      %302 = sbr.rel (0) target = $region45
    $region44: #{tpu_custom_call.1} parent=1 // pred_region
      %304 = dma.done [#allocation5], 256
    $region45: #{tpu_custom_call.1} parent=1 // pred_fallthru
      _
    %305 = vsyncpa [#allocation5], 1

</llo_original>
